<compile_context>
chip_gen: v5e
topology: v5e:2x2
jax: 0.10.0
libtpu: 0.0.40
codegen_flags: <defaults>
</compile_context>

<pallas_src>
import functools

import jax
import jax.numpy as jnp
from jax.experimental import pallas as pl
from jax.experimental.pallas import tpu as pltpu


# -----------------------------------------------------------------------------
# Fused GEMM kernel:  out = maybe_relu(X @ W + bias)
#   X, W are bf16 tiles; accumulation + epilogue in f32.
# -----------------------------------------------------------------------------
def _gemm_bias_act_kernel(x_ref, w_ref, b_ref, o_ref, acc_ref, *, relu):
    @pl.when(pl.program_id(2) == 0)
    def _():
        acc_ref[...] = jnp.zeros_like(acc_ref)

    acc_ref[...] += jnp.dot(
        x_ref[...], w_ref[...], preferred_element_type=jnp.float32
    )

    @pl.when(pl.program_id(2) == pl.num_programs(2) - 1)
    def _():
        y = acc_ref[...] + b_ref[...]              # (tm,tn) + (1,tn), f32
        if relu:
            y = jnp.maximum(y, 0.0)
        o_ref[...] = y.astype(o_ref.dtype)


# -----------------------------------------------------------------------------
# Small helpers
# -----------------------------------------------------------------------------
def _round_up(x, m):
    return ((x + m - 1) // m) * m


def _pad_axis(x, axis, mult):
    pad = -x.shape[axis] % mult
    if pad == 0:
        return x
    widths = [(0, 0)] * x.ndim
    widths[axis] = (0, pad)
    return jnp.pad(x, widths)


def _choose_tile(dim, max_tile, align=128):
    """Largest tile <= max_tile (multiple of 128) that minimizes padding of dim."""
    dim_r = _round_up(dim, align)
    if dim_r <= max_tile:
        return dim_r
    nblocks = -(-dim_r // max_tile)                # ceil
    return _round_up(-(-dim_r // nblocks), align)  # ceil(dim_r/nblocks), aligned


# -----------------------------------------------------------------------------
# GEMM on pre-packed (bf16, tile-padded, (K,N)-layout) weights.
# -----------------------------------------------------------------------------
def gemm_packed(x, pk, *, relu, tm, out_dtype=jnp.float32):
    """x: (M, K) any float dtype; pk: packed weight dict. Returns (M, n) out_dtype."""
    M, K = x.shape
    Kp, Np = pk["w"].shape
    tn, tk = pk["tn"], pk["tk"]

    # Only the (tiny at batch=2) activation gets padded/cast per call.
    xp = jnp.pad(x.astype(jnp.bfloat16), ((0, -M % tm), (0, Kp - K)))
    Mp = xp.shape[0]
    grid = (Mp // tm, Np // tn, Kp // tk)

    out = pl.pallas_call(
        functools.partial(_gemm_bias_act_kernel, relu=relu),
        out_shape=jax.ShapeDtypeStruct((Mp, Np), out_dtype),
        grid_spec=pltpu.PrefetchScalarGridSpec(
            num_scalar_prefetch=0,
            grid=grid,
            in_specs=[
                pl.BlockSpec((tm, tk), lambda i, j, k: (i, k)),
                pl.BlockSpec((tk, tn), lambda i, j, k: (k, j)),
                pl.BlockSpec((1, tn), lambda i, j, k: (0, j)),
            ],
            out_specs=pl.BlockSpec((tm, tn), lambda i, j, k: (i, j)),
            scratch_shapes=[pltpu.VMEM((tm, tn), jnp.float32)],
        ),
        compiler_params=pltpu.CompilerParams(
            dimension_semantics=("parallel", "parallel", "arbitrary"),
            # Safe on v7x (64 MiB/TC); largest double-buffered fc w tile ~15 MiB.
            # (v5e/v6e could go to 48-64 MiB with full-N fc tiles; conservative
            #  single setting kept for portability.)
            vmem_limit_bytes=32 * 1024 * 1024,
        ),
    )(xp, pk["w"], pk["b"])
    return out[:M, :pk["n"]]


# -----------------------------------------------------------------------------
# Weight pre-packing (one-time, at init)
# -----------------------------------------------------------------------------
_BN_EPS = 1e-5


def _pack_gemm_weights(w_kn, bias, tn, tk):
    """w_kn: (K,N) f32, bias: (N,) f32 -> tile-padded bf16 weight + f32 bias row."""
    wp = _pad_axis(_pad_axis(w_kn, 0, tk), 1, tn).astype(jnp.bfloat16)
    bp = _pad_axis(bias.reshape(1, -1).astype(jnp.float32), 1, tn)
    return {"w": wp, "b": bp, "n": w_kn.shape[1], "tn": tn, "tk": tk}


def pack_conv_bn(p):
    """Fold BN into the conv weights and pack for the Pallas GEMM (done once)."""
    cout, cin = p["w"].shape[0], p["w"].shape[1]
    # (Cout,Cin,KH,KW) -> (KH,KW,Cin,Cout) -> (9*Cin, Cout), matching patch order.
    wmat = jnp.transpose(p["w"], (2, 3, 1, 0)).reshape(9 * cin, cout)
    s = p["gamma"] * jax.lax.rsqrt(p["var"] + _BN_EPS)
    wmat = wmat * s[None, :]
    bias = (p["b"] - p["mean"]) * s + p["beta"]
    tk = _choose_tile(9 * cin, 256)   # conv1: 128 (K=27); others 256
    tn = _choose_tile(cout, 128)      # 128 -> j>=2 blocks for conv2..5 (v7x TCs)
    return _pack_gemm_weights(wmat, bias, tn, tk)


def pack_linear(p, *, max_tn=2048, max_tk=2048):
    """PyTorch Linear (out,in) -> packed (K,N) bf16 weights (done once)."""
    w_kn = p["w"].T
    tk = _choose_tile(w_kn.shape[0], max_tk)   # fc1: 1920, fc2/fc3: 2048
    tn = _choose_tile(w_kn.shape[1], max_tn)   # fc1/fc2: 2048, fc3: 128
    return _pack_gemm_weights(w_kn, p["b"], tn, tk)


# -----------------------------------------------------------------------------
# Layer glue (im2col / pooling in plain JAX; GEMM in Pallas).
# -----------------------------------------------------------------------------
def conv3x3_bn_relu(x, pk):
    """x: (N,H,W,Cin) NHWC, same-padding 3x3 conv + folded BN + ReLU -> bf16."""
    N, H, W, Cin = x.shape
    xp = jnp.pad(x, ((0, 0), (1, 1), (1, 1), (0, 0)))
    # TODO(synk): for larger batches fold the 3x3 taps into the GEMM k-grid via
    # the x BlockSpec index_map instead of materializing the 9x im2col matrix.
    patches = [xp[:, kh:kh + H, kw:kw + W, :] for kh in range(3) for kw in range(3)]
    cols = jnp.concatenate(patches, axis=-1).reshape(N * H * W, 9 * Cin)
    M = N * H * W
    tm = 128 if M > 128 else 64        # M=98 (conv3/4/5) -> 2 'parallel' i blocks
    y = gemm_packed(cols, pk, relu=True, tm=tm, out_dtype=jnp.bfloat16)
    return y.reshape(N, H, W, pk["n"])


def linear(x, pk, *, relu):
    """x: (N, in) -> (N, out) f32; fc GEMM with large tk/tn tiles."""
    M = x.shape[0]
    tm = min(128, _round_up(max(M, 16), 16))   # batch=2 -> tm=16 (bf16 sublanes)
    return gemm_packed(x, pk, relu=relu, tm=tm, out_dtype=jnp.float32)


def maxpool_3x3_s2(x):
    """x: (N,H,W,C) -> (N,Ho,Wo,C); kernel 3, stride 2, no padding.
    XLA-fused maximum tree over 9 shifted strided views (no 9x materialization)."""
    N, H, W, C = x.shape
    Ho = (H - 3) // 2 + 1
    Wo = (W - 3) // 2 + 1
    out = None
    for dh in range(3):
        for dw in range(3):
            v = x[:, dh:dh + 2 * Ho - 1:2, dw:dw + 2 * Wo - 1:2, :]
            out = v if out is None else jnp.maximum(out, v)
    return out


def adaptive_avg_pool_nhwc(x, out_hw=(6, 6)):
    """Matches torch AdaptiveAvgPool2d bin formula; tiny reduction kept as glue."""
    x = x.astype(jnp.float32)
    N, H, W, C = x.shape
    Ho, Wo = out_hw
    rows = []
    for i in range(Ho):
        h0, h1 = (i * H) // Ho, -((-(i + 1) * H) // Ho)
        cols = []
        for j in range(Wo):
            w0, w1 = (j * W) // Wo, -((-(j + 1) * W) // Wo)
            cols.append(jnp.mean(x[:, h0:h1, w0:w1, :], axis=(1, 2)))
        rows.append(jnp.stack(cols, axis=1))
    return jnp.stack(rows, axis=1)  # (N, Ho, Wo, C)


# -----------------------------------------------------------------------------
# Parameter init (deterministic, synthetic) — shapes follow the nn.Module.
# Raw PyTorch-shaped params are built, then immediately pre-packed for the GEMM.
# -----------------------------------------------------------------------------
def _conv_bn_params(key, cin, cout):
    k = jax.random.split(key, 6)
    return {
        "w": 0.05 * jax.random.normal(k[0], (cout, cin, 3, 3), jnp.float32),
        "b": 0.05 * jax.random.normal(k[1], (cout,), jnp.float32),
        "gamma": 1.0 + 0.1 * jax.random.normal(k[2], (cout,), jnp.float32),
        "beta": 0.1 * jax.random.normal(k[3], (cout,), jnp.float32),
        "mean": 0.1 * jax.random.normal(k[4], (cout,), jnp.float32),
        "var": 1.0 + 0.1 * jnp.abs(jax.random.normal(k[5], (cout,), jnp.float32)),
    }


def _linear_params(key, fin, fout):
    k = jax.random.split(key, 2)
    return {
        "w": 0.02 * jax.random.normal(k[0], (fout, fin), jnp.float32),
        "b": 0.02 * jax.random.normal(k[1], (fout,), jnp.float32),
    }


def init_alexnet_params(key, num_classes=10):
    ks = jax.random.split(key, 8)
    raw = {
        "conv1": _conv_bn_params(ks[0], 3, 64),
        "conv2": _conv_bn_params(ks[1], 64, 192),
        "conv3": _conv_bn_params(ks[2], 192, 384),
        "conv4": _conv_bn_params(ks[3], 384, 256),
        "conv5": _conv_bn_params(ks[4], 256, 256),
        "fc1": _linear_params(ks[5], 256 * 6 * 6, 4096),
        "fc2": _linear_params(ks[6], 4096, 4096),
        "fc3": _linear_params(ks[7], 4096, num_classes),
    }
    # One-time pre-pack: BN fold, (K,N) transpose, bf16 cast, tile padding.
    packed = {name: pack_conv_bn(raw[name]) for name in
              ("conv1", "conv2", "conv3", "conv4", "conv5")}
    packed.update({name: pack_linear(raw[name]) for name in ("fc1", "fc2", "fc3")})
    # Materialize now so the forward pass streams only ready-to-use bf16 weights.
    return jax.tree_util.tree_map(
        lambda a: jax.block_until_ready(a) if isinstance(a, jax.Array) else a,
        packed)


# -----------------------------------------------------------------------------
# Forward pass
# -----------------------------------------------------------------------------
def alexnet_forward(params, x_nchw):
    x = jnp.transpose(x_nchw, (0, 2, 3, 1)).astype(jnp.float32)  # NCHW -> NHWC

    x = conv3x3_bn_relu(x, params["conv1"])
    x = maxpool_3x3_s2(x)
    x = conv3x3_bn_relu(x, params["conv2"])
    x = maxpool_3x3_s2(x)
    x = conv3x3_bn_relu(x, params["conv3"])
    x = conv3x3_bn_relu(x, params["conv4"])
    x = conv3x3_bn_relu(x, params["conv5"])

    x = adaptive_avg_pool_nhwc(x, (6, 6))            # (N,6,6,256) f32
    x = jnp.transpose(x, (0, 3, 1, 2))               # back to NCHW for flatten(1)
    x = x.reshape(x.shape[0], -1)                    # (N, 256*6*6)

    # Dropout: identity under eval-mode (inference) semantics.
    x = linear(x, params["fc1"], relu=True)
    x = linear(x, params["fc2"], relu=True)
    x = linear(x, params["fc3"], relu=False)
    return x


if __name__ == "__main__":
    key = jax.random.PRNGKey(0)
    pkey, xkey = jax.random.split(key)
    params = init_alexnet_params(pkey, num_classes=10)

    # Small CIFAR-style input (batch=2, 3x32x32, NCHW like PyTorch).
    x = jax.random.normal(xkey, (2, 3, 32, 32), jnp.float32)

    logits = alexnet_forward(params, x)
    jax.block_until_ready(logits)
    assert logits.shape == (2, 10), logits.shape
    print("KERNEL_OK")
</pallas_src>

<mosaic_0001>
module attributes {stable_mosaic.version = 11 : i64} {
  func.func @_gemm_bias_act_kernel(%arg0: i32, %arg1: i32, %arg2: i32, %arg3: memref<128x128xbf16, #tpu.memory_space<vmem>>, %arg4: memref<128x128xbf16, #tpu.memory_space<vmem>>, %arg5: memref<1x128xf32, #tpu.memory_space<vmem>>, %arg6: memref<128x128xbf16, #tpu.memory_space<vmem>>, %arg7: memref<128x128xf32, #tpu.memory_space<vmem>>) attributes {dimension_semantics = [#tpu.dimension_semantics<parallel>, #tpu.dimension_semantics<parallel>, #tpu.dimension_semantics<arbitrary>], iteration_bounds = array<i64: 16, 1, 1>, scalar_prefetch = 0 : i64, scratch_operands = 1 : i64, tpu.core_type = #tpu.core_type<tc>, window_params = [{transform_indices = @transform_0, window_bounds = array<i64: 128, 128>}, {transform_indices = @transform_1, window_bounds = array<i64: 128, 128>}, {transform_indices = @transform_2, window_bounds = array<i64: 1, 128>}, {transform_indices = @transform_3, window_bounds = array<i64: 128, 128>}]} {
    %c0_i32 = arith.constant 0 : i32
    %0 = arith.cmpi eq, %arg2, %c0_i32 : i32
    %1 = arith.extui %0 : i1 to i32
    %c0_i32_0 = arith.constant 0 : i32
    %2 = arith.cmpi ne, %1, %c0_i32_0 : i32
    scf.if %2 {
      %cst_10 = arith.constant 0.000000e+00 : f32
      %12 = vector.broadcast %cst_10 : f32 to vector<128x128xf32>
      %c0_11 = arith.constant 0 : index
      %c0_12 = arith.constant 0 : index
      %13 = vector.load %arg7[%c0_11, %c0_12] : memref<128x128xf32, #tpu.memory_space<vmem>>, vector<128x128xf32>
      tpu.vector_store %arg7[%c0_11, %c0_12], %12 {strides = array<i32>} : memref<128x128xf32, #tpu.memory_space<vmem>>, vector<128x128xf32>,
    } else {
    }
    %c0 = arith.constant 0 : index
    %c0_1 = arith.constant 0 : index
    %3 = vector.load %arg7[%c0, %c0_1] : memref<128x128xf32, #tpu.memory_space<vmem>>, vector<128x128xf32>
    %c0_2 = arith.constant 0 : index
    %c0_3 = arith.constant 0 : index
    %4 = vector.load %arg3[%c0_2, %c0_3] : memref<128x128xbf16, #tpu.memory_space<vmem>>, vector<128x128xbf16>
    %c0_4 = arith.constant 0 : index
    %c0_5 = arith.constant 0 : index
    %5 = vector.load %arg4[%c0_4, %c0_5] : memref<128x128xbf16, #tpu.memory_space<vmem>>, vector<128x128xbf16>
    %cst = arith.constant dense<0.000000e+00> : vector<128x128xf32>
    %6 = tpu.matmul %4, %5, %cst {dimension_numbers = #tpu.dot_dimension_numbers<[1], [0], [0], [1], [0, 0, 1, 1], [], []>} : vector<128x128xbf16>, vector<128x128xbf16>, vector<128x128xf32> -> vector<128x128xf32>
    %7 = arith.addf %3, %6 : vector<128x128xf32>
    %c0_6 = arith.constant 0 : index
    %c0_7 = arith.constant 0 : index
    %8 = vector.load %arg7[%c0_6, %c0_7] : memref<128x128xf32, #tpu.memory_space<vmem>>, vector<128x128xf32>
    tpu.vector_store %arg7[%c0_6, %c0_7], %7 {strides = array<i32>} : memref<128x128xf32, #tpu.memory_space<vmem>>, vector<128x128xf32>,
    %c0_i32_8 = arith.constant 0 : i32
    %9 = arith.cmpi eq, %arg2, %c0_i32_8 : i32
    %10 = arith.extui %9 : i1 to i32
    %c0_i32_9 = arith.constant 0 : i32
    %11 = arith.cmpi ne, %10, %c0_i32_9 : i32
    scf.if %11 {
      %c0_10 = arith.constant 0 : index
      %c0_11 = arith.constant 0 : index
      %12 = vector.load %arg7[%c0_10, %c0_11] : memref<128x128xf32, #tpu.memory_space<vmem>>, vector<128x128xf32>
      %c0_12 = arith.constant 0 : index
      %c0_13 = arith.constant 0 : index
      %13 = vector.load %arg5[%c0_12, %c0_13] : memref<1x128xf32, #tpu.memory_space<vmem>>, vector<1x128xf32>
      %14 = vector.broadcast %13 : vector<1x128xf32> to vector<128x128xf32>
      %15 = arith.addf %12, %14 : vector<128x128xf32>
      %cst_14 = arith.constant 0.000000e+00 : f32
      %16 = vector.broadcast %cst_14 : f32 to vector<128x128xf32>
      %17 = arith.maximumf %15, %16 : vector<128x128xf32>
      %18 = arith.truncf %17 : vector<128x128xf32> to vector<128x128xbf16>
      %c0_15 = arith.constant 0 : index
      %c0_16 = arith.constant 0 : index
      %19 = vector.load %arg6[%c0_15, %c0_16] : memref<128x128xbf16, #tpu.memory_space<vmem>>, vector<128x128xbf16>
      tpu.vector_store %arg6[%c0_15, %c0_16], %18 {strides = array<i32>} : memref<128x128xbf16, #tpu.memory_space<vmem>>, vector<128x128xbf16>,
    } else {
    }
    return
  }
  func.func @transform_0(%arg0: i32, %arg1: i32, %arg2: i32) -> (i32, i32) {
    %c0_i32 = arith.constant 0 : i32
    return %arg0, %arg2 : i32, i32
  }
  func.func @transform_1(%arg0: i32, %arg1: i32, %arg2: i32) -> (i32, i32) {
    %c0_i32 = arith.constant 0 : i32
    return %arg2, %arg1 : i32, i32
  }
  func.func @transform_2(%arg0: i32, %arg1: i32, %arg2: i32) -> (i32, i32) {
    %c0_i32 = arith.constant 0 : i32
    %c0_i32_0 = arith.constant 0 : i32
    return %c0_i32, %arg1 : i32, i32
  }
  func.func @transform_3(%arg0: i32, %arg1: i32, %arg2: i32) -> (i32, i32) {
    %c0_i32 = arith.constant 0 : i32
    return %arg0, %arg1 : i32, i32
  }
}

</mosaic_0001>

<llo_original>
// kernel: tpu_custom_call.1
$region0: #{tpu_custom_call.1}
  #allocation0 [shape = 'u32[]', space=smem, size = 0x4, offset = 0x4, fixed_abs, tag = 'smem constant byte address 0x4 - core index']
  #allocation1 [shape = 'u32[72,128]{1,0:T(1,128)}', space=vmem, size = 0x9000, scoped, tag = 'internal scratch']
  #allocation2 [shape = 'f32[128,128]{1,0:T(8,128)}', space=vmem, size = 0x10000, scoped, tag = 'scratch operand']
  %s0 = inlined_call_operand.hbm [shape: bf16[2048,128], index: 0, kind: input, shape index: {}]
  %s1 = inlined_call_operand.hbm [shape: bf16[128,128], index: 1, kind: input, shape index: {}]
  %s2 = inlined_call_operand.vmem [shape: f32[1,128], index: 2, kind: input, shape index: {}]
  %s3 = inlined_call_operand.hbm [shape: bf16[2048,128], index: 3, kind: output, shape index: {}]
  %s4 = sld [smem:[#allocation0]]
  $region61: #{tpu_custom_call.1} parent=0
    _
  %s6 = ssub.s32 1, %s4
  %s7 = scalar_select 0, %s6, %s4
  $region1: #{tpu_custom_call.1} parent=0
    #allocation3 [shape = 'u8[65536]{0}', space=vmem, size = 0x10000, scoped, tag = 'input window, operand 0']
    #allocation4 [shape = 's32[2]{0}', space=sflag, size = 0x8, scoped, tag = 'scoped memory for tpu_custom_call.1']
    #allocation5 [shape = 's32[2]{0}', space=sflag, size = 0x8, scoped, tag = 'scoped memory for tpu_custom_call.1']
    #allocation6 [shape = 'u8[32768]{0}', space=vmem, size = 0x8000, scoped, tag = 'input window, operand 1, single buffered']
    #allocation7 [shape = 's32[1]{0}', space=sflag, size = 0x4, scoped, tag = 'scoped memory for tpu_custom_call.1']
    #allocation8 [shape = 'u8[65536]{0}', space=vmem, size = 0x10000, scoped, tag = 'output window, operand 0']
    %8 = vsyncpa [#allocation4], 0
    %s9 = scalar_lea.sflag [#allocation4], 1
    %10 = vsyncpa %s9, 0
    %11 = vsyncpa [#allocation7], 0
    %12 = vsyncpa [#allocation5], 0
    %s13 = scalar_lea.sflag [#allocation5], 1
    %14 = vsyncpa %s13, 0
    loop: start=0, step=1, limit=18
    $region2: #{tpu_custom_call.1} parent=1 // loop_pre_header
      _
    $region3: #{tpu_custom_call.1} parent=1 // loop_header
      %s16 = sphi 0, %s20
      %p17 = scmp.ge.s32.totalorder %s16, 18
      %s23 = sphi 0, %s42
      %s24 = sphi 0, %s38
      %s25 = sphi 0, %s34
      %s26 = sphi 0, %s23
      %s27 = sphi 0, %s24
      %s28 = sphi 0, %s25
      %s29 = sphi 0, %s26
      %s30 = sphi 0, %s27
      %s31 = sphi 0, %s28
      %s47 = sphi 0, %s49
      %s50 = sphi 0, %s47
      %s51 = sphi 0, %s50
      %s67 = sphi 0, %s51
      %s75 = sphi 0, %s77
      %s78 = sphi 0, %s75
      %s79 = sphi 0, %s78
      %s95 = sphi 0, %s79
      %s101 = sphi 0, %s103
      %s104 = sphi 0, %s101
      %s105 = sphi 0, %s104
      %s121 = sphi 0, %s105
      %s129 = sphi 0, %s131
      %s132 = sphi 0, %s129
      %s133 = sphi 0, %s132
      %s149 = sphi 0, %s133
    $region4: #{tpu_custom_call.1} parent=1 // loop_header_branch
      %19 = sbr.rel (%p17) target = $region8
    $region5: #{tpu_custom_call.1} parent=1 // loop_body
      %s21 = ssub.s32 %s16, 1
      %s22 = ssub.s32 %s16, 2
      %s32 = sadd.s32 1, %s25
      %p33 = scmp.ge.s32.totalorder %s32, 1
      %s34 = scalar_select %p33, 0, %s32
      %s35 = sadd.s32 1, %s24
      %s36 = scalar_select %p33, %s35, %s24
      %p37 = scmp.ge.s32.totalorder %s36, 1
      %s38 = scalar_select %p37, 0, %s36
      %s39 = sadd.s32 1, %s23
      %s40 = scalar_select %p37, %s39, %s23
      %p41 = scmp.ge.s32.totalorder %s40, 16
      %s42 = scalar_select %p41, 0, %s40
      %s43 = ssub.s32 %s23, %s42
      %s44 = ssub.s32 %s25, %s34
      %s45 = sor.u32 %s43, %s44
      %p46 = scmp.eq.s32.totalorder %s45, 0
      %s48 = sadd.s32 %s47, 1
      %s49 = scalar_select %p46, %s47, %s48
      %p52 = pneg %p46
      %p53 = scmp.eq.s32.totalorder %s16, 15
      %p54 = por %p52, %p53
      %p55 = scmp.ne.s32.totalorder %s47, %s50
      %p56 = scmp.eq.s32.totalorder %s16, 0
      %p57 = por %p55, %p56
      %p58 = scmp.ne.s32.totalorder %s47, %s50
      %p59 = scmp.eq.s32.totalorder %s21, 15
      %p60 = por %p58, %p59
      %p61 = scmp.ne.s32.totalorder %s50, %s51
      %p62 = scmp.eq.s32.totalorder %s21, 0
      %p63 = por %p61, %p62
      %p64 = scmp.ne.s32.totalorder %s50, %s51
      %p65 = scmp.eq.s32.totalorder %s22, 15
      %p66 = por %p64, %p65
      %p68 = scmp.ne.s32.totalorder %s51, %s67
      %p69 = scmp.eq.s32.totalorder %s22, 0
      %p70 = por %p68, %p69
      %s71 = ssub.s32 %s25, %s34
      %s72 = ssub.s32 %s24, %s38
      %s73 = sor.u32 %s71, %s72
      %p74 = scmp.eq.s32.totalorder %s73, 0
      %s76 = sadd.s32 %s75, 1
      %s77 = scalar_select %p74, %s75, %s76
      %p80 = pneg %p74
      %p81 = scmp.eq.s32.totalorder %s16, 15
      %p82 = por %p80, %p81
      %p83 = scmp.ne.s32.totalorder %s75, %s78
      %p84 = scmp.eq.s32.totalorder %s16, 0
      %p85 = por %p83, %p84
      %p86 = scmp.ne.s32.totalorder %s75, %s78
      %p87 = scmp.eq.s32.totalorder %s21, 15
      %p88 = por %p86, %p87
      %p89 = scmp.ne.s32.totalorder %s78, %s79
      %p90 = scmp.eq.s32.totalorder %s21, 0
      %p91 = por %p89, %p90
      %p92 = scmp.ne.s32.totalorder %s78, %s79
      %p93 = scmp.eq.s32.totalorder %s22, 15
      %p94 = por %p92, %p93
      %p96 = scmp.ne.s32.totalorder %s79, %s95
      %p97 = scmp.eq.s32.totalorder %s22, 0
      %p98 = por %p96, %p97
      %s99 = ssub.s32 %s24, %s38
      %p100 = scmp.eq.s32.totalorder %s99, 0
      %s102 = sadd.s32 %s101, 1
      %s103 = scalar_select %p100, %s101, %s102
      %p106 = pneg %p100
      %p107 = scmp.eq.s32.totalorder %s16, 15
      %p108 = por %p106, %p107
      %p109 = scmp.ne.s32.totalorder %s101, %s104
      %p110 = scmp.eq.s32.totalorder %s16, 0
      %p111 = por %p109, %p110
      %p112 = scmp.ne.s32.totalorder %s101, %s104
      %p113 = scmp.eq.s32.totalorder %s21, 15
      %p114 = por %p112, %p113
      %p115 = scmp.ne.s32.totalorder %s104, %s105
      %p116 = scmp.eq.s32.totalorder %s21, 0
      %p117 = por %p115, %p116
      %p118 = scmp.ne.s32.totalorder %s104, %s105
      %p119 = scmp.eq.s32.totalorder %s22, 15
      %p120 = por %p118, %p119
      %p122 = scmp.ne.s32.totalorder %s105, %s121
      %p123 = scmp.eq.s32.totalorder %s22, 0
      %p124 = por %p122, %p123
      %s125 = ssub.s32 %s23, %s42
      %s126 = ssub.s32 %s24, %s38
      %s127 = sor.u32 %s125, %s126
      %p128 = scmp.eq.s32.totalorder %s127, 0
      %s130 = sadd.s32 %s129, 1
      %s131 = scalar_select %p128, %s129, %s130
      %p134 = pneg %p128
      %p135 = scmp.eq.s32.totalorder %s16, 15
      %p136 = por %p134, %p135
      %p137 = scmp.ne.s32.totalorder %s129, %s132
      %p138 = scmp.eq.s32.totalorder %s16, 0
      %p139 = por %p137, %p138
      %p140 = scmp.ne.s32.totalorder %s129, %s132
      %p141 = scmp.eq.s32.totalorder %s21, 15
      %p142 = por %p140, %p141
      %p143 = scmp.ne.s32.totalorder %s132, %s133
      %p144 = scmp.eq.s32.totalorder %s21, 0
      %p145 = por %p143, %p144
      %p146 = scmp.ne.s32.totalorder %s132, %s133
      %p147 = scmp.eq.s32.totalorder %s22, 15
      %p148 = por %p146, %p147
      %p150 = scmp.ne.s32.totalorder %s133, %s149
      %p151 = scmp.eq.s32.totalorder %s22, 0
      %p152 = por %p150, %p151
      %p153 = scmp.le.s32.totalorder 1, %s16
      %p154 = scmp.lt.s32.totalorder %s16, 17
      %p155 = pnand %p153, %p154
      %p156 = pneg %p155
      // Predicated region
      $region9: #{tpu_custom_call.1} parent=5 // pred_check
        _
      $region10: #{tpu_custom_call.1} parent=5 // pred_check_branch
        %158 = sbr.rel (%p155) target = $region12
      $region11: #{tpu_custom_call.1} parent=5 // pred_region
        %s159 = ssub.s32 %s16, 1
        // Predicated region
        $region13: #{tpu_custom_call.1} parent=11 // pred_check
          %p160 = pneg %p91
        $region14: #{tpu_custom_call.1} parent=11 // pred_check_branch
          %162 = sbr.rel (%p160) target = $region16
        $region15: #{tpu_custom_call.1} parent=11 // pred_region
          %s163 = smul.u32 16, %s28
          %165 = vsyncadd [#allocation7], 0
          %s166 = sadd.s32 %s27, %s163
          %s167 = smul.addr %s166, 4
          %s168 = scalar_lea.hbm %s1, %s167
          %s169 = sshll.u32 %s168, 4
          %s170 = int_to_ptr.hbm [resolvable:$true] %s169
          %s171 = sshll.u32 [#allocation6], 4
          %s172 = int_to_ptr.vmem [resolvable:$true] %s171
          %177 = dma.hbm_to_vmem [thread:$0]  %s170, 1024, %s172, [#allocation7], 64, 64, 4
        $region16: #{tpu_custom_call.1} parent=11 // pred_fallthru
          _
        // Predicated region
        $region17: #{tpu_custom_call.1} parent=11 // pred_check
          %p178 = pneg %p117
        $region18: #{tpu_custom_call.1} parent=11 // pred_check_branch
          %180 = sbr.rel (%p178) target = $region20
        $region19: #{tpu_custom_call.1} parent=11 // pred_region
          %p181 = scmp.lt.s32.totalorder %s27, 0
          %s182 = scalar_select %p181, %s27, 0
          %s183 = scalar_lea.vmem %s2, %s182
        $region20: #{tpu_custom_call.1} parent=11 // pred_fallthru
          _
      $region12: #{tpu_custom_call.1} parent=5 // pred_fallthru
        _
      %p184 = scmp.lt.s32.totalorder %s16, 16
      // Predicated region
      $region21: #{tpu_custom_call.1} parent=5 // pred_check
        %p185 = pneg %p184
      $region22: #{tpu_custom_call.1} parent=5 // pred_check_branch
        %187 = sbr.rel (%p185) target = $region24
      $region23: #{tpu_custom_call.1} parent=5 // pred_region
        // Predicated region
        $region25: #{tpu_custom_call.1} parent=23 // pred_check
          %p188 = pneg %p57
        $region26: #{tpu_custom_call.1} parent=23 // pred_check_branch
          %190 = sbr.rel (%p188) target = $region28
        $region27: #{tpu_custom_call.1} parent=23 // pred_region
          %s191 = sand.u32 %s47, 1
          %s192 = scalar_lea.sflag [#allocation4], %s191
          %s193 = sand.u32 %s47, 1
          %s194 = smul.addr %s193, 64
          %s195 = scalar_lea.vmem [#allocation3], %s194
          %s196 = smul.u32 16, %s23
          %198 = vsyncadd %s192, 0
          %s199 = sadd.s32 %s25, %s196
          %s200 = smul.addr %s199, 4
          %s201 = scalar_lea.hbm %s0, %s200
          %s202 = sshll.u32 %s201, 4
          %s203 = int_to_ptr.hbm [resolvable:$true] %s202
          %s204 = sshll.u32 %s195, 4
          %s205 = int_to_ptr.vmem [resolvable:$true] %s204
          %210 = dma.hbm_to_vmem [thread:$0]  %s203, 1024, %s205, %s192, 64, 64, 4
        $region28: #{tpu_custom_call.1} parent=23 // pred_fallthru
          _
      $region24: #{tpu_custom_call.1} parent=5 // pred_fallthru
        _
      %p211 = scmp.le.s32.totalorder 1, %s16
      %p212 = scmp.lt.s32.totalorder %s16, 17
      %p213 = pnand %p211, %p212
      %p214 = pneg %p213
      // Predicated region
      $region29: #{tpu_custom_call.1} parent=5 // pred_check
        _
      $region30: #{tpu_custom_call.1} parent=5 // pred_check_branch
        %216 = sbr.rel (%p213) target = $region32
      $region31: #{tpu_custom_call.1} parent=5 // pred_region
        %s217 = ssub.s32 %s16, 1
        %s218 = sand.u32 %s50, 1
        %s219 = scalar_lea.sflag [#allocation4], %s218
        %s220 = sand.u32 %s50, 1
        %s221 = smul.addr %s220, 64
        %s222 = scalar_lea.vmem [#allocation3], %s221
        // Predicated region
        $region33: #{tpu_custom_call.1} parent=31 // pred_check
          %p223 = pneg %p63
        $region34: #{tpu_custom_call.1} parent=31 // pred_check_branch
          %225 = sbr.rel (%p223) target = $region36
        $region35: #{tpu_custom_call.1} parent=31 // pred_region
          %227 = dma.done %s219, 1024
        $region36: #{tpu_custom_call.1} parent=31 // pred_fallthru
          _
        // Predicated region
        $region37: #{tpu_custom_call.1} parent=31 // pred_check
          %p228 = pneg %p91
        $region38: #{tpu_custom_call.1} parent=31 // pred_check_branch
          %230 = sbr.rel (%p228) target = $region40
        $region39: #{tpu_custom_call.1} parent=31 // pred_region
          %232 = dma.done [#allocation7], 1024
        $region40: #{tpu_custom_call.1} parent=31 // pred_fallthru
          _
        %s233 = sand.u32 %s50, 1
        %s234 = scalar_lea.sflag [#allocation4], %s233
        %s235 = sand.u32 %s50, 1
        %s236 = smul.addr %s235, 64
        %s237 = scalar_lea.vmem [#allocation3], %s236
        %p238 = pneg %p63
        %p239 = pneg %p60
        %p240 = pneg %p91
        %p241 = pneg %p88
        %p242 = scmp.lt.s32.totalorder %s27, 0
        %s243 = scalar_select %p242, %s27, 0
        %s244 = scalar_lea.vmem %s2, %s243
        %p245 = pneg %p117
        %p246 = pneg %p114
        %p247 = pneg %p145
        %p248 = pneg %p142
        %s249 = sand.u32 %s132, 1
        %s250 = scalar_lea.sflag [#allocation5], %s249
        %s251 = sand.u32 %s132, 1
        %s252 = smul.addr %s251, 64
        %s253 = scalar_lea.vmem [#allocation8], %s252
        %s254 = smul.u32 16, %s26
        %s255 = smul.u32 16, %s28
        %p256 = scmp.lt.s32.totalorder %s27, 0
        %s257 = scalar_select %p256, %s27, 0
        %s258 = scalar_lea.vmem %s2, %s257
        %s259 = smul.u32 16, %s26
        %p260 = scmp.eq.s32.totalorder %s28, 0
        // Predicated region
        $region41: #{tpu_custom_call.1} parent=31 // pred_check
          %p261 = pneg %p260
        $region42: #{tpu_custom_call.1} parent=31 // pred_check_branch
          %263 = sbr.rel (%p261) target = $region44
        $region43: #{tpu_custom_call.1} parent=31 // pred_region
          %264 = vst [vmem:[#allocation2] sm:$0xff] 0.0
          %265 = vst [vmem:[#allocation2 + $0x8] sm:$0xff] 0.0
          %266 = vst [vmem:[#allocation2 + $0x10] sm:$0xff] 0.0
          %267 = vst [vmem:[#allocation2 + $0x18] sm:$0xff] 0.0
          %268 = vst [vmem:[#allocation2 + $0x20] sm:$0xff] 0.0
          %269 = vst [vmem:[#allocation2 + $0x28] sm:$0xff] 0.0
          %270 = vst [vmem:[#allocation2 + $0x30] sm:$0xff] 0.0
          %271 = vst [vmem:[#allocation2 + $0x38] sm:$0xff] 0.0
          %272 = vst [vmem:[#allocation2 + $0x40] sm:$0xff] 0.0
          %273 = vst [vmem:[#allocation2 + $0x48] sm:$0xff] 0.0
          %274 = vst [vmem:[#allocation2 + $0x50] sm:$0xff] 0.0
          %275 = vst [vmem:[#allocation2 + $0x58] sm:$0xff] 0.0
          %276 = vst [vmem:[#allocation2 + $0x60] sm:$0xff] 0.0
          %277 = vst [vmem:[#allocation2 + $0x68] sm:$0xff] 0.0
          %278 = vst [vmem:[#allocation2 + $0x70] sm:$0xff] 0.0
          %279 = vst [vmem:[#allocation2 + $0x78] sm:$0xff] 0.0
        $region44: #{tpu_custom_call.1} parent=31 // pred_fallthru
          _
        %v280 = vld [vmem:[#allocation2] sm:$0xff]
        %v281 = vld [vmem:[#allocation2 + $0x8] sm:$0xff]
        %v282 = vld [vmem:[#allocation2 + $0x10] sm:$0xff]
        %v283 = vld [vmem:[#allocation2 + $0x18] sm:$0xff]
        %v284 = vld [vmem:[#allocation2 + $0x20] sm:$0xff]
        %v285 = vld [vmem:[#allocation2 + $0x28] sm:$0xff]
        %v286 = vld [vmem:[#allocation2 + $0x30] sm:$0xff]
        %v287 = vld [vmem:[#allocation2 + $0x38] sm:$0xff]
        %v288 = vld [vmem:[#allocation2 + $0x40] sm:$0xff]
        %v289 = vld [vmem:[#allocation2 + $0x48] sm:$0xff]
        %v290 = vld [vmem:[#allocation2 + $0x50] sm:$0xff]
        %v291 = vld [vmem:[#allocation2 + $0x58] sm:$0xff]
        %v292 = vld [vmem:[#allocation2 + $0x60] sm:$0xff]
        %v293 = vld [vmem:[#allocation2 + $0x68] sm:$0xff]
        %v294 = vld [vmem:[#allocation2 + $0x70] sm:$0xff]
        %v295 = vld [vmem:[#allocation2 + $0x78] sm:$0xff]
        %v296 = vld [vmem:[%s222] sm:$0xf]
        %v297 = vld [vmem:[%s222 + $0x4] sm:$0xf]
        %v298 = vld [vmem:[%s222 + $0x8] sm:$0xf]
        %v299 = vld [vmem:[%s222 + $0xc] sm:$0xf]
        %v300 = vld [vmem:[%s222 + $0x10] sm:$0xf]
        %v301 = vld [vmem:[%s222 + $0x14] sm:$0xf]
        %v302 = vld [vmem:[%s222 + $0x18] sm:$0xf]
        %v303 = vld [vmem:[%s222 + $0x1c] sm:$0xf]
        %v304 = vld [vmem:[%s222 + $0x20] sm:$0xf]
        %v305 = vld [vmem:[%s222 + $0x24] sm:$0xf]
        %v306 = vld [vmem:[%s222 + $0x28] sm:$0xf]
        %v307 = vld [vmem:[%s222 + $0x2c] sm:$0xf]
        %v308 = vld [vmem:[%s222 + $0x30] sm:$0xf]
        %v309 = vld [vmem:[%s222 + $0x34] sm:$0xf]
        %v310 = vld [vmem:[%s222 + $0x38] sm:$0xf]
        %v311 = vld [vmem:[%s222 + $0x3c] sm:$0xf]
        %v312 = vld [vmem:[#allocation6] sm:$0xf]
        %v313 = vld [vmem:[#allocation6 + $0x4] sm:$0xf]
        %v314 = vld [vmem:[#allocation6 + $0x8] sm:$0xf]
        %v315 = vld [vmem:[#allocation6 + $0xc] sm:$0xf]
        %v316 = vld [vmem:[#allocation6 + $0x10] sm:$0xf]
        %v317 = vld [vmem:[#allocation6 + $0x14] sm:$0xf]
        %v318 = vld [vmem:[#allocation6 + $0x18] sm:$0xf]
        %v319 = vld [vmem:[#allocation6 + $0x1c] sm:$0xf]
        %v320 = vld [vmem:[#allocation6 + $0x20] sm:$0xf]
        %v321 = vld [vmem:[#allocation6 + $0x24] sm:$0xf]
        %v322 = vld [vmem:[#allocation6 + $0x28] sm:$0xf]
        %v323 = vld [vmem:[#allocation6 + $0x2c] sm:$0xf]
        %v324 = vld [vmem:[#allocation6 + $0x30] sm:$0xf]
        %v325 = vld [vmem:[#allocation6 + $0x34] sm:$0xf]
        %v326 = vld [vmem:[#allocation6 + $0x38] sm:$0xf]
        %v327 = vld [vmem:[#allocation6 + $0x3c] sm:$0xf]
        %v344 = vunpack.c.l.b16 %v296
        %v345 = vunpack.c.l.b16 %v297
        %v346 = vunpack.c.l.b16 %v298
        %v347 = vunpack.c.l.b16 %v299
        %v348 = vunpack.c.l.b16 %v300
        %v349 = vunpack.c.l.b16 %v301
        %v350 = vunpack.c.l.b16 %v302
        %v351 = vunpack.c.l.b16 %v303
        %v352 = vunpack.c.l.b16 %v304
        %v353 = vunpack.c.l.b16 %v305
        %v354 = vunpack.c.l.b16 %v306
        %v355 = vunpack.c.l.b16 %v307
        %v356 = vunpack.c.l.b16 %v308
        %v357 = vunpack.c.l.b16 %v309
        %v358 = vunpack.c.l.b16 %v310
        %v359 = vunpack.c.l.b16 %v311
        %v360 = vpack.c.b16 %v345, %v344
        %v361 = vpack.c.b16 %v347, %v346
        %v362 = vpack.c.b16 %v349, %v348
        %v363 = vpack.c.b16 %v351, %v350
        %v364 = vpack.c.b16 %v353, %v352
        %v365 = vpack.c.b16 %v355, %v354
        %v366 = vpack.c.b16 %v357, %v356
        %v367 = vpack.c.b16 %v359, %v358
        %v392 = vunpack.c.l.b16 %v312
        %v393 = vunpack.c.l.b16 %v313
        %v394 = vunpack.c.l.b16 %v314
        %v395 = vunpack.c.l.b16 %v315
        %v396 = vunpack.c.l.b16 %v316
        %v397 = vunpack.c.l.b16 %v317
        %v398 = vunpack.c.l.b16 %v318
        %v399 = vunpack.c.l.b16 %v319
        %v400 = vunpack.c.l.b16 %v320
        %v401 = vunpack.c.l.b16 %v321
        %v402 = vunpack.c.l.b16 %v322
        %v403 = vunpack.c.l.b16 %v323
        %v404 = vunpack.c.l.b16 %v324
        %v405 = vunpack.c.l.b16 %v325
        %v406 = vunpack.c.l.b16 %v326
        %v407 = vunpack.c.l.b16 %v327
        %v408 = vpack.c.b16 %v393, %v392
        %v409 = vpack.c.b16 %v395, %v394
        %v410 = vpack.c.b16 %v397, %v396
        %v411 = vpack.c.b16 %v399, %v398
        %v412 = vpack.c.b16 %v401, %v400
        %v413 = vpack.c.b16 %v403, %v402
        %v414 = vpack.c.b16 %v405, %v404
        %v415 = vpack.c.b16 %v407, %v406
        %424 = vmatpush.bf16.msra.mxu0 %v415
        %425 = vmatpush.bf16.msra.mxu0 %v414
        %426 = vmatpush.bf16.msra.mxu0 %v413
        %427 = vmatpush.bf16.msra.mxu0 %v412
        %428 = vmatpush.bf16.msra.mxu0 %v411
        %429 = vmatpush.bf16.msra.mxu0 %v410
        %430 = vmatpush.bf16.msra.mxu0 %v409
        %431 = vmatpush.bf16.msra.mxu0 %v408
        %432 = vmatmul.bf16.gmra.mxu0 %v360
        %v433 = vpop.f32.mrf.mxu0
        %v434 = vadd.f32 0.0, %v433
        %v435 = vpop.f32.mrf.mxu0
        %v436 = vadd.f32 0.0, %v435
        %437 = vmatmul.bf16.gmra.mxu0 %v361
        %v438 = vpop.f32.mrf.mxu0
        %v439 = vadd.f32 0.0, %v438
        %v440 = vpop.f32.mrf.mxu0
        %v441 = vadd.f32 0.0, %v440
        %442 = vmatmul.bf16.gmra.mxu0 %v362
        %v443 = vpop.f32.mrf.mxu0
        %v444 = vadd.f32 0.0, %v443
        %v445 = vpop.f32.mrf.mxu0
        %v446 = vadd.f32 0.0, %v445
        %447 = vmatmul.bf16.gmra.mxu0 %v363
        %v448 = vpop.f32.mrf.mxu0
        %v449 = vadd.f32 0.0, %v448
        %v450 = vpop.f32.mrf.mxu0
        %v451 = vadd.f32 0.0, %v450
        %452 = vmatmul.bf16.gmra.mxu0 %v364
        %v453 = vpop.f32.mrf.mxu0
        %v454 = vadd.f32 0.0, %v453
        %v455 = vpop.f32.mrf.mxu0
        %v456 = vadd.f32 0.0, %v455
        %457 = vmatmul.bf16.gmra.mxu0 %v365
        %v458 = vpop.f32.mrf.mxu0
        %v459 = vadd.f32 0.0, %v458
        %v460 = vpop.f32.mrf.mxu0
        %v461 = vadd.f32 0.0, %v460
        %462 = vmatmul.bf16.gmra.mxu0 %v366
        %v463 = vpop.f32.mrf.mxu0
        %v464 = vadd.f32 0.0, %v463
        %v465 = vpop.f32.mrf.mxu0
        %v466 = vadd.f32 0.0, %v465
        %467 = vmatmul.bf16.gmra.mxu0 %v367
        %v468 = vpop.f32.mrf.mxu0
        %v469 = vadd.f32 0.0, %v468
        %v470 = vpop.f32.mrf.mxu0
        %v471 = vadd.f32 0.0, %v470
        %472 = vdwg.mxu0
        %v473 = vadd.f32 %v280, %v434
        %v474 = vadd.f32 %v281, %v436
        %v475 = vadd.f32 %v282, %v439
        %v476 = vadd.f32 %v283, %v441
        %v477 = vadd.f32 %v284, %v444
        %v478 = vadd.f32 %v285, %v446
        %v479 = vadd.f32 %v286, %v449
        %v480 = vadd.f32 %v287, %v451
        %v481 = vadd.f32 %v288, %v454
        %v482 = vadd.f32 %v289, %v456
        %v483 = vadd.f32 %v290, %v459
        %v484 = vadd.f32 %v291, %v461
        %v485 = vadd.f32 %v292, %v464
        %v486 = vadd.f32 %v293, %v466
        %v487 = vadd.f32 %v294, %v469
        %v488 = vadd.f32 %v295, %v471
        %489 = vst [vmem:[#allocation2] sm:$0xff] %v473
        %490 = vst [vmem:[#allocation2 + $0x8] sm:$0xff] %v474
        %491 = vst [vmem:[#allocation2 + $0x10] sm:$0xff] %v475
        %492 = vst [vmem:[#allocation2 + $0x18] sm:$0xff] %v476
        %493 = vst [vmem:[#allocation2 + $0x20] sm:$0xff] %v477
        %494 = vst [vmem:[#allocation2 + $0x28] sm:$0xff] %v478
        %495 = vst [vmem:[#allocation2 + $0x30] sm:$0xff] %v479
        %496 = vst [vmem:[#allocation2 + $0x38] sm:$0xff] %v480
        %497 = vst [vmem:[#allocation2 + $0x40] sm:$0xff] %v481
        %498 = vst [vmem:[#allocation2 + $0x48] sm:$0xff] %v482
        %499 = vst [vmem:[#allocation2 + $0x50] sm:$0xff] %v483
        %500 = vst [vmem:[#allocation2 + $0x58] sm:$0xff] %v484
        %501 = vst [vmem:[#allocation2 + $0x60] sm:$0xff] %v485
        %502 = vst [vmem:[#allocation2 + $0x68] sm:$0xff] %v486
        %503 = vst [vmem:[#allocation2 + $0x70] sm:$0xff] %v487
        %504 = vst [vmem:[#allocation2 + $0x78] sm:$0xff] %v488
        // Predicated region
        $region45: #{tpu_custom_call.1} parent=31 // pred_check
          %p505 = pneg %p260
        $region46: #{tpu_custom_call.1} parent=31 // pred_check_branch
          %507 = sbr.rel (%p505) target = $region48
        $region47: #{tpu_custom_call.1} parent=31 // pred_region
          %v508 = vld [vmem:[#allocation2] sm:$0xff]
          %v509 = vld [vmem:[#allocation2 + $0x8] sm:$0xff]
          %v510 = vld [vmem:[#allocation2 + $0x10] sm:$0xff]
          %v511 = vld [vmem:[#allocation2 + $0x18] sm:$0xff]
          %v512 = vld [vmem:[#allocation2 + $0x20] sm:$0xff]
          %v513 = vld [vmem:[#allocation2 + $0x28] sm:$0xff]
          %v514 = vld [vmem:[#allocation2 + $0x30] sm:$0xff]
          %v515 = vld [vmem:[#allocation2 + $0x38] sm:$0xff]
          %v516 = vld [vmem:[#allocation2 + $0x40] sm:$0xff]
          %v517 = vld [vmem:[#allocation2 + $0x48] sm:$0xff]
          %v518 = vld [vmem:[#allocation2 + $0x50] sm:$0xff]
          %v519 = vld [vmem:[#allocation2 + $0x58] sm:$0xff]
          %v520 = vld [vmem:[#allocation2 + $0x60] sm:$0xff]
          %v521 = vld [vmem:[#allocation2 + $0x68] sm:$0xff]
          %v522 = vld [vmem:[#allocation2 + $0x70] sm:$0xff]
          %v523 = vld [vmem:[#allocation2 + $0x78] sm:$0xff]
          %v524 = vld [vmem:[%s258] sm:$0x1]
          %v526 = vperm.slane %v524, 0
          %v528 = vadd.f32 %v508, %v526
          %v529 = vadd.f32 %v509, %v526
          %v530 = vadd.f32 %v510, %v526
          %v531 = vadd.f32 %v511, %v526
          %v532 = vadd.f32 %v512, %v526
          %v533 = vadd.f32 %v513, %v526
          %v534 = vadd.f32 %v514, %v526
          %v535 = vadd.f32 %v515, %v526
          %v536 = vadd.f32 %v516, %v526
          %v537 = vadd.f32 %v517, %v526
          %v538 = vadd.f32 %v518, %v526
          %v539 = vadd.f32 %v519, %v526
          %v540 = vadd.f32 %v520, %v526
          %v541 = vadd.f32 %v521, %v526
          %v542 = vadd.f32 %v522, %v526
          %v543 = vadd.f32 %v523, %v526
          %v544 = vmax.f32 %v528, 0.0
          %v545 = vmax.f32 %v529, 0.0
          %v546 = vmax.f32 %v530, 0.0
          %v547 = vmax.f32 %v531, 0.0
          %v548 = vmax.f32 %v532, 0.0
          %v549 = vmax.f32 %v533, 0.0
          %v550 = vmax.f32 %v534, 0.0
          %v551 = vmax.f32 %v535, 0.0
          %v552 = vmax.f32 %v536, 0.0
          %v553 = vmax.f32 %v537, 0.0
          %v554 = vmax.f32 %v538, 0.0
          %v555 = vmax.f32 %v539, 0.0
          %v556 = vmax.f32 %v540, 0.0
          %v557 = vmax.f32 %v541, 0.0
          %v558 = vmax.f32 %v542, 0.0
          %v559 = vmax.f32 %v543, 0.0
          %v560 = vpack.c.bf16 %v544, %v544
          %v561 = vpack.c.bf16 %v545, %v545
          %v562 = vpack.c.bf16 %v546, %v546
          %v563 = vpack.c.bf16 %v547, %v547
          %v564 = vpack.c.bf16 %v548, %v548
          %v565 = vpack.c.bf16 %v549, %v549
          %v566 = vpack.c.bf16 %v550, %v550
          %v567 = vpack.c.bf16 %v551, %v551
          %v568 = vpack.c.bf16 %v552, %v552
          %v569 = vpack.c.bf16 %v553, %v553
          %v570 = vpack.c.bf16 %v554, %v554
          %v571 = vpack.c.bf16 %v555, %v555
          %v572 = vpack.c.bf16 %v556, %v556
          %v573 = vpack.c.bf16 %v557, %v557
          %v574 = vpack.c.bf16 %v558, %v558
          %v575 = vpack.c.bf16 %v559, %v559
          %576 = vst [vmem:[%s253] sm:$0xf] %v560
          %577 = vst [vmem:[%s253 + $0x4] sm:$0xf] %v561
          %578 = vst [vmem:[%s253 + $0x8] sm:$0xf] %v562
          %579 = vst [vmem:[%s253 + $0xc] sm:$0xf] %v563
          %580 = vst [vmem:[%s253 + $0x10] sm:$0xf] %v564
          %581 = vst [vmem:[%s253 + $0x14] sm:$0xf] %v565
          %582 = vst [vmem:[%s253 + $0x18] sm:$0xf] %v566
          %583 = vst [vmem:[%s253 + $0x1c] sm:$0xf] %v567
          %584 = vst [vmem:[%s253 + $0x20] sm:$0xf] %v568
          %585 = vst [vmem:[%s253 + $0x24] sm:$0xf] %v569
          %586 = vst [vmem:[%s253 + $0x28] sm:$0xf] %v570
          %587 = vst [vmem:[%s253 + $0x2c] sm:$0xf] %v571
          %588 = vst [vmem:[%s253 + $0x30] sm:$0xf] %v572
          %589 = vst [vmem:[%s253 + $0x34] sm:$0xf] %v573
          %590 = vst [vmem:[%s253 + $0x38] sm:$0xf] %v574
          %591 = vst [vmem:[%s253 + $0x3c] sm:$0xf] %v575
        $region48: #{tpu_custom_call.1} parent=31 // pred_fallthru
          _
        %s592 = sand.u32 %s132, 1
        %s593 = scalar_lea.sflag [#allocation5], %s592
        %s594 = sand.u32 %s132, 1
        %s595 = smul.addr %s594, 64
        %s596 = scalar_lea.vmem [#allocation8], %s595
        // Predicated region
        $region49: #{tpu_custom_call.1} parent=31 // pred_check
          %p597 = pneg %p142
        $region50: #{tpu_custom_call.1} parent=31 // pred_check_branch
          %599 = sbr.rel (%p597) target = $region52
        $region51: #{tpu_custom_call.1} parent=31 // pred_region
          %s600 = smul.u32 16, %s26
          %602 = vsyncadd %s593, 0
          %s603 = sadd.s32 %s27, %s600
          %s604 = smul.addr %s603, 4
          %s605 = scalar_lea.hbm %s3, %s604
          %s606 = sshll.u32 %s596, 4
          %s607 = int_to_ptr.vmem [resolvable:$true] %s606
          %s608 = sshll.u32 %s605, 4
          %s609 = int_to_ptr.hbm [resolvable:$true] %s608
          %614 = dma.vmem_to_hbm [thread:$0]  %s607, 1024, %s609, %s593, 64, 64, 4
        $region52: #{tpu_custom_call.1} parent=31 // pred_fallthru
          _
      $region32: #{tpu_custom_call.1} parent=5 // pred_fallthru
        _
      %p615 = scmp.le.s32.totalorder 2, %s16
      // Predicated region
      $region53: #{tpu_custom_call.1} parent=5 // pred_check
        %p616 = pneg %p615
      $region54: #{tpu_custom_call.1} parent=5 // pred_check_branch
        %618 = sbr.rel (%p616) target = $region56
      $region55: #{tpu_custom_call.1} parent=5 // pred_region
        %s619 = ssub.s32 %s16, 2
        // Predicated region
        $region57: #{tpu_custom_call.1} parent=55 // pred_check
          %p620 = pneg %p148
        $region58: #{tpu_custom_call.1} parent=55 // pred_check_branch
          %622 = sbr.rel (%p620) target = $region60
        $region59: #{tpu_custom_call.1} parent=55 // pred_region
          %s623 = sand.u32 %s133, 1
          %s624 = scalar_lea.sflag [#allocation5], %s623
          %s625 = sand.u32 %s133, 1
          %s626 = smul.addr %s625, 64
          %s627 = scalar_lea.vmem [#allocation8], %s626
          %629 = dma.done %s624, 1024
        $region60: #{tpu_custom_call.1} parent=55 // pred_fallthru
          _
      $region56: #{tpu_custom_call.1} parent=5 // pred_fallthru
        _
    $region6: #{tpu_custom_call.1} parent=1 // loop_footer
      %s20 = sadd.s32 1, %s16
    $region7: #{tpu_custom_call.1} parent=1 // loop_footer_branch
      %15 = sbr.rel target = $region3
    $region8: #{tpu_custom_call.1} parent=1 // loop_exit
      _
    %630 = vsyncpa [#allocation4], 1
    %s631 = scalar_lea.sflag [#allocation4], 1
    %632 = vsyncpa %s631, 1
    %633 = vsyncpa [#allocation7], 1
    %634 = vsyncpa [#allocation5], 1
    %s635 = scalar_lea.sflag [#allocation5], 1
    %636 = vsyncpa %s635, 1

</llo_original>
